<compile_context>
chip_gen: v5e
topology: v5e:2x2
jax: 0.10.0
libtpu: 0.0.40
codegen_flags: <defaults>
</compile_context>

<pallas_src>
import functools

import jax
import jax.numpy as jnp
from jax.experimental import pallas as pl
from jax.experimental.pallas import tpu as pltpu

LN_EPS = 1e-5  # nn.LayerNorm default


def _round_up(n, m):
    return ((n + m - 1) // m) * m


def _pad_cols(a, cols):
    pc = cols - a.shape[-1]
    if pc:
        a = jnp.pad(a, [(0, 0)] * (a.ndim - 1) + [(0, pc)])
    return a


def _pad2d(a, rows, cols):
    pr, pc = rows - a.shape[0], cols - a.shape[1]
    if pr or pc:
        a = jnp.pad(a, ((0, pr), (0, pc)))
    return a


def ffn_kernel(x_ref, w1_ref, b1_ref, w2_ref, b2_ref, gamma_ref, beta_ref,
               o_ref, y_acc_ref, *, d_model):
    """Grid = (row tiles, d_ff chunks).

    Per (i, f): y_acc += relu(x @ W1[:, f-chunk] + b1[f-chunk]) @ W2[f-chunk, :]
    At the last f chunk: add bias2 + residual, LayerNorm over the true d_model,
    store the row tile.
    """
    f = pl.program_id(1)
    nf = pl.num_programs(1)

    x_in = x_ref[...]                       # (tm, Dp); block resident across f

    # conv1 (kernel_size=1) chunk == x @ W1_chunk + b1_chunk, then ReLU.
    # ReLU is elementwise over d_ff, so applying it per chunk is exact.
    h = jnp.dot(x_in.astype(w1_ref.dtype), w1_ref[...],
                preferred_element_type=jnp.float32) + b1_ref[...]
    h = jnp.maximum(h, 0.0)

    # conv2 chunk: partial product, accumulated in f32.
    y_chunk = jnp.dot(h.astype(w2_ref.dtype), w2_ref[...],
                      preferred_element_type=jnp.float32)

    @pl.when(f == 0)
    def _():
        y_acc_ref[...] = y_chunk

    @pl.when(f != 0)
    def _():
        y_acc_ref[...] += y_chunk

    @pl.when(f == nf - 1)
    def _():
        # bias2 + residual (f32), then LayerNorm over the *true* d_model.
        # Invariant: padded feature columns of x, W2, b2, gamma, beta are all
        # zero, so padded columns of y are exactly zero and sums over the
        # padded width equal sums over d_model; only the centered term needs a
        # mask for the variance.
        y = y_acc_ref[...] + b2_ref[...] + x_in.astype(jnp.float32)
        d_pad = y.shape[-1]
        inv_d = 1.0 / d_model
        mean = jnp.sum(y, axis=-1, keepdims=True) * inv_d
        yc = y - mean
        if d_pad != d_model:
            mask = jax.lax.broadcasted_iota(jnp.int32, (1, d_pad), 1) < d_model
            yc = jnp.where(mask, yc, 0.0)
        var = jnp.sum(yc * yc, axis=-1, keepdims=True) * inv_d
        normed = yc * jax.lax.rsqrt(var + LN_EPS)
        o_ref[...] = (normed * gamma_ref[...] + beta_ref[...]).astype(o_ref.dtype)


def _vmem_budget_bytes():
    """Generation-aware VMEM budget: ~75% of physical capacity (v5e/v6e have
    128 MiB, v7x 64 MiB per TensorCore), capped at 100 MiB."""
    try:
        phys = pltpu.get_tpu_info().vmem_capacity_bytes
    except Exception:
        phys = 64 << 20                  # conservative (v7x-sized) fallback
    return min(int(phys * 3 // 4), 100 << 20)


def poswise_ffn(x, w1, b1, w2, b2, gamma, beta, *,
                tm=None, tf=512, matmul_dtype=jnp.bfloat16):
    """x: (B, S, d_model) -> (B, S, d_model).

    tm:           row tile (rows of B*S per grid step).  Default is chosen per
                  generation: 512 on v5e/v6e (128 MiB VMEM), 256 on v7x
                  (64 MiB VMEM).  Forced so the rows axis has >= 2 grid steps
                  when possible (keeps both v7x TensorCores busy); sweep
                  256-1024 on v6e/v5e.
    tf:           d_ff chunk streamed per grid step (multiple of 128).  512-1024
                  keeps the MXU fed while weight-chunk DMA overlaps compute.
    matmul_dtype: MXU operand dtype for weights + LHS (default bf16, the native
                  MXU input dtype on every generation).  Accumulation, residual
                  and LayerNorm are always f32.  Pass jnp.float32 for exact
                  f32 matmuls.
    """
    B, S, d_model = x.shape
    d_ff = w1.shape[1]
    assert w1.shape == (d_model, d_ff) and w2.shape == (d_ff, d_model)
    assert b1.shape == (d_ff,) and b2.shape == (d_model,)
    assert gamma.shape == (d_model,) and beta.shape == (d_model,)
    out_dtype = x.dtype

    rows = B * S
    d_pad = _round_up(d_model, 128)          # lane-dense feature width
    f_pad0 = _round_up(d_ff, 128)

    budget = _vmem_budget_bytes()
    if tm is None:
        tm = 512 if budget >= (80 << 20) else 256   # v5e/v6e vs v7x default

    # Row tile: multiple of 8 sublanes; force >= 2 steps on the "parallel" rows
    # axis whenever rows allow it, so v7x's second TensorCore isn't idle.
    tm_eff = max(8, min(int(tm), _round_up(pl.cdiv(rows, 2), 8)))
    tm_eff = _round_up(tm_eff, 8)

    # d_ff chunk: multiple of 128 lanes (W1/W2 stream chunk-by-chunk).
    tf_eff = max(128, min(_round_up(int(tf), 128), f_pad0))

    w_dtype = jnp.dtype(matmul_dtype if matmul_dtype is not None else w1.dtype)
    x_itemsize = jnp.dtype(x.dtype).itemsize
    o_itemsize = jnp.dtype(out_dtype).itemsize

    def _vmem_estimate(tm_e, tf_e):
        est = 2 * tm_e * d_pad * (x_itemsize + o_itemsize)   # x + out tiles (2 bufs)
        est += 2 * 2 * d_pad * tf_e * w_dtype.itemsize       # W1 + W2 chunks (2 bufs)
        est += 2 * 8 * (tf_e + 3 * d_pad) * 4                # b1 chunk, b2, gamma, beta
        est += tm_e * d_pad * 4                              # f32 y accumulator scratch
        est += tm_e * (tf_e + d_pad) * 4                     # h / y_chunk intermediates
        est += tm_e * (tf_e + d_pad) * w_dtype.itemsize      # matmul-dtype operand copies
        return est

    # Shrink the f chunk first, then the row tile, if the working set would
    # overflow the generation-aware VMEM budget.
    while _vmem_estimate(tm_eff, tf_eff) > budget and tf_eff > 128:
        tf_eff = max(128, _round_up(tf_eff // 2, 128))
    while _vmem_estimate(tm_eff, tf_eff) > budget and tm_eff > 8:
        tm_eff = max(8, _round_up(tm_eff // 2, 8))

    f_pad = _round_up(f_pad0, tf_eff)
    nf = f_pad // tf_eff
    grid = (pl.cdiv(rows, tm_eff), nf)

    # --- operand prep (feature padding only; rows are never padded/copied) ---
    x2d = x.reshape(rows, d_model)
    if d_pad != d_model:
        x2d = _pad_cols(x2d, d_pad)          # zero-pad features for lane density

    w1_p = _pad2d(w1, d_pad, f_pad).astype(w_dtype)
    w2_p = _pad2d(w2, f_pad, d_pad).astype(w_dtype)
    b1_p = _pad_cols(b1.reshape(1, d_ff).astype(jnp.float32), f_pad)
    b2_p = _pad_cols(b2.reshape(1, d_model).astype(jnp.float32), d_pad)
    gamma_p = _pad_cols(gamma.reshape(1, d_model).astype(jnp.float32), d_pad)
    beta_p = _pad_cols(beta.reshape(1, d_model).astype(jnp.float32), d_pad)

    vmem_limit = int(min(max(int(_vmem_estimate(tm_eff, tf_eff) * 1.4) + (4 << 20),
                             32 << 20),
                         budget))

    cost = pl.CostEstimate(                   # true (unpadded) dims
        flops=4 * rows * d_model * d_ff,
        transcendentals=rows,
        bytes_accessed=(rows * d_model * x_itemsize
                        + rows * d_model * o_itemsize
                        + (d_model * d_ff + d_ff * d_model) * w_dtype.itemsize
                        + (d_ff + 3 * d_model) * 4),
    )

    kernel = functools.partial(ffn_kernel, d_model=d_model)

    out2d = pl.pallas_call(
        kernel,
        out_shape=jax.ShapeDtypeStruct((rows, d_pad), out_dtype),
        grid_spec=pltpu.PrefetchScalarGridSpec(
            num_scalar_prefetch=0,
            grid=grid,
            in_specs=[
                pl.BlockSpec((tm_eff, d_pad), lambda i, f: (i, 0)),   # x rows tile
                pl.BlockSpec((d_pad, tf_eff), lambda i, f: (0, f)),   # W1 column chunk
                pl.BlockSpec((1, tf_eff), lambda i, f: (0, f)),       # b1 chunk
                pl.BlockSpec((tf_eff, d_pad), lambda i, f: (f, 0)),   # W2 row chunk
                pl.BlockSpec((1, d_pad), lambda i, f: (0, 0)),        # b2
                pl.BlockSpec((1, d_pad), lambda i, f: (0, 0)),        # LN gamma
                pl.BlockSpec((1, d_pad), lambda i, f: (0, 0)),        # LN beta
            ],
            out_specs=pl.BlockSpec((tm_eff, d_pad), lambda i, f: (i, 0)),
            scratch_shapes=[pltpu.VMEM((tm_eff, d_pad), jnp.float32)],
        ),
        compiler_params=pltpu.CompilerParams(
            dimension_semantics=("parallel", "arbitrary"),
            vmem_limit_bytes=vmem_limit,
        ),
        cost_estimate=cost,
    )(x2d, w1_p, b1_p, w2_p, b2_p, gamma_p, beta_p)

    if d_pad != d_model:
        out2d = out2d[:, :d_model]
    return out2d.reshape(B, S, d_model)


def reference_ffn(x, w1, b1, w2, b2, gamma, beta):
    h = jnp.maximum(jnp.einsum("bsd,df->bsf", x, w1) + b1, 0.0)
    y = jnp.einsum("bsf,fd->bsd", h, w2) + b2 + x
    mean = jnp.mean(y, axis=-1, keepdims=True)
    var = jnp.mean((y - mean) ** 2, axis=-1, keepdims=True)
    return (y - mean) * jax.lax.rsqrt(var + LN_EPS) * gamma + beta


if __name__ == "__main__":
    key = jax.random.PRNGKey(0)
    ks = jax.random.split(key, 10)

    # --- Case 1: tiny module-like shape; d_model=32 < 128 exercises feature
    # padding, rows=16 with the >=2-row-steps rule exercises a 2-step rows grid.
    B, S, d_model, d_ff = 2, 8, 32, 64
    x = jax.random.normal(ks[0], (B, S, d_model), dtype=jnp.float32)
    w1 = jax.random.normal(ks[1], (d_model, d_ff), dtype=jnp.float32) * 0.05   # conv1.weight.T
    b1 = jax.random.normal(ks[2], (d_ff,), dtype=jnp.float32) * 0.05           # conv1.bias
    w2 = jax.random.normal(ks[3], (d_ff, d_model), dtype=jnp.float32) * 0.05   # conv2.weight.T
    b2 = jax.random.normal(ks[4], (d_model,), dtype=jnp.float32) * 0.05        # conv2.bias
    gamma = jnp.ones((d_model,), dtype=jnp.float32)                            # layer_norm.weight
    beta = jnp.zeros((d_model,), dtype=jnp.float32)                            # layer_norm.bias

    ref = reference_ffn(x, w1, b1, w2, b2, gamma, beta)

    out_f32 = jax.block_until_ready(
        poswise_ffn(x, w1, b1, w2, b2, gamma, beta, matmul_dtype=jnp.float32))
    assert out_f32.shape == (B, S, d_model)
    assert jnp.allclose(out_f32, ref, atol=1e-4, rtol=1e-4), "f32 path mismatch"

    out_bf16 = jax.block_until_ready(poswise_ffn(x, w1, b1, w2, b2, gamma, beta))
    assert jnp.allclose(out_bf16, ref, atol=5e-2, rtol=5e-2), "bf16 path mismatch"

    # --- Case 2: lane-aligned dims, multiple d_ff chunks (tf=128 -> 4 chunks),
    # multi-step rows grid with a partial (masked) last row tile (rows=24).
    B2, S2, dm2, df2 = 3, 8, 128, 512
    x2 = jax.random.normal(ks[5], (B2, S2, dm2), dtype=jnp.float32)
    w1b = jax.random.normal(ks[6], (dm2, df2), dtype=jnp.float32) * 0.05
    b1b = jax.random.normal(ks[7], (df2,), dtype=jnp.float32) * 0.05
    w2b = jax.random.normal(ks[8], (df2, dm2), dtype=jnp.float32) * 0.05
    b2b = jax.random.normal(ks[9], (dm2,), dtype=jnp.float32) * 0.05
    gamma2 = jnp.ones((dm2,), dtype=jnp.float32)
    beta2 = jnp.zeros((dm2,), dtype=jnp.float32)

    ref2 = reference_ffn(x2, w1b, b1b, w2b, b2b, gamma2, beta2)

    out2 = jax.block_until_ready(
        poswise_ffn(x2, w1b, b1b, w2b, b2b, gamma2, beta2,
                    tm=16, tf=128, matmul_dtype=jnp.float32))
    assert out2.shape == (B2, S2, dm2)
    assert jnp.allclose(out2, ref2, atol=1e-4, rtol=1e-4), "chunked f32 mismatch"

    out2_bf = jax.block_until_ready(
        poswise_ffn(x2, w1b, b1b, w2b, b2b, gamma2, beta2, tf=128))
    assert jnp.allclose(out2_bf, ref2, atol=5e-2, rtol=5e-2), "chunked bf16 mismatch"

    print("KERNEL_OK")
</pallas_src>

<mosaic_0001>
module attributes {stable_mosaic.version = 11 : i64} {
  func.func @ffn_kernel(%arg0: i32, %arg1: i32, %arg2: memref<8x128xf32, #tpu.memory_space<vmem>>, %arg3: memref<128x128xf32, #tpu.memory_space<vmem>>, %arg4: memref<1x128xf32, #tpu.memory_space<vmem>>, %arg5: memref<128x128xf32, #tpu.memory_space<vmem>>, %arg6: memref<1x128xf32, #tpu.memory_space<vmem>>, %arg7: memref<1x128xf32, #tpu.memory_space<vmem>>, %arg8: memref<1x128xf32, #tpu.memory_space<vmem>>, %arg9: memref<8x128xf32, #tpu.memory_space<vmem>>, %arg10: memref<8x128xf32, #tpu.memory_space<vmem>>) attributes {dimension_semantics = [#tpu.dimension_semantics<parallel>, #tpu.dimension_semantics<arbitrary>], iteration_bounds = array<i64: 2, 1>, scalar_prefetch = 0 : i64, scratch_operands = 1 : i64, tpu.core_type = #tpu.core_type<tc>, window_params = [{transform_indices = @transform_0, window_bounds = array<i64: 8, 128>}, {transform_indices = @transform_1, window_bounds = array<i64: 128, 128>}, {transform_indices = @transform_2, window_bounds = array<i64: 1, 128>}, {transform_indices = @transform_3, window_bounds = array<i64: 128, 128>}, {pipeline_mode = #tpu.pipeline_mode<synchronous>, transform_indices = @transform_4, window_bounds = array<i64: 1, 128>}, {pipeline_mode = #tpu.pipeline_mode<synchronous>, transform_indices = @transform_5, window_bounds = array<i64: 1, 128>}, {pipeline_mode = #tpu.pipeline_mode<synchronous>, transform_indices = @transform_6, window_bounds = array<i64: 1, 128>}, {transform_indices = @transform_7, window_bounds = array<i64: 8, 128>}]} {
    %c0 = arith.constant 0 : index
    %c0_0 = arith.constant 0 : index
    %0 = vector.load %arg2[%c0, %c0_0] : memref<8x128xf32, #tpu.memory_space<vmem>>, vector<8x128xf32>
    %c0_1 = arith.constant 0 : index
    %c0_2 = arith.constant 0 : index
    %1 = vector.load %arg3[%c0_1, %c0_2] : memref<128x128xf32, #tpu.memory_space<vmem>>, vector<128x128xf32>
    %cst = arith.constant dense<0.000000e+00> : vector<8x128xf32>
    %2 = tpu.matmul %0, %1, %cst {dimension_numbers = #tpu.dot_dimension_numbers<[1], [0], [0], [1], [0, 0, 1, 1], [], []>} : vector<8x128xf32>, vector<128x128xf32>, vector<8x128xf32> -> vector<8x128xf32>
    %c0_3 = arith.constant 0 : index
    %c0_4 = arith.constant 0 : index
    %3 = vector.load %arg4[%c0_3, %c0_4] : memref<1x128xf32, #tpu.memory_space<vmem>>, vector<1x128xf32>
    %4 = vector.broadcast %3 : vector<1x128xf32> to vector<8x128xf32>
    %5 = arith.addf %2, %4 : vector<8x128xf32>
    %cst_5 = arith.constant 0.000000e+00 : f32
    %6 = vector.broadcast %cst_5 : f32 to vector<8x128xf32>
    %7 = arith.maximumf %5, %6 : vector<8x128xf32>
    %c0_6 = arith.constant 0 : index
    %c0_7 = arith.constant 0 : index
    %8 = vector.load %arg5[%c0_6, %c0_7] : memref<128x128xf32, #tpu.memory_space<vmem>>, vector<128x128xf32>
    %cst_8 = arith.constant dense<0.000000e+00> : vector<8x128xf32>
    %9 = tpu.matmul %7, %8, %cst_8 {dimension_numbers = #tpu.dot_dimension_numbers<[1], [0], [0], [1], [0, 0, 1, 1], [], []>} : vector<8x128xf32>, vector<128x128xf32>, vector<8x128xf32> -> vector<8x128xf32>
    %c0_i32 = arith.constant 0 : i32
    %10 = arith.cmpi eq, %arg1, %c0_i32 : i32
    %11 = arith.extui %10 : i1 to i32
    %c0_i32_9 = arith.constant 0 : i32
    %12 = arith.cmpi ne, %11, %c0_i32_9 : i32
    scf.if %12 {
      %c0_14 = arith.constant 0 : index
      %c0_15 = arith.constant 0 : index
      %19 = vector.load %arg10[%c0_14, %c0_15] : memref<8x128xf32, #tpu.memory_space<vmem>>, vector<8x128xf32>
      tpu.vector_store %arg10[%c0_14, %c0_15], %9 {strides = array<i32>} : memref<8x128xf32, #tpu.memory_space<vmem>>, vector<8x128xf32>,
    } else {
    }
    %c0_i32_10 = arith.constant 0 : i32
    %13 = arith.cmpi ne, %arg1, %c0_i32_10 : i32
    %14 = arith.extui %13 : i1 to i32
    %c0_i32_11 = arith.constant 0 : i32
    %15 = arith.cmpi ne, %14, %c0_i32_11 : i32
    scf.if %15 {
      %c0_14 = arith.constant 0 : index
      %c0_15 = arith.constant 0 : index
      %19 = vector.load %arg10[%c0_14, %c0_15] : memref<8x128xf32, #tpu.memory_space<vmem>>, vector<8x128xf32>
      %20 = arith.addf %19, %9 : vector<8x128xf32>
      %c0_16 = arith.constant 0 : index
      %c0_17 = arith.constant 0 : index
      %21 = vector.load %arg10[%c0_16, %c0_17] : memref<8x128xf32, #tpu.memory_space<vmem>>, vector<8x128xf32>
      tpu.vector_store %arg10[%c0_16, %c0_17], %20 {strides = array<i32>} : memref<8x128xf32, #tpu.memory_space<vmem>>, vector<8x128xf32>,
    } else {
    }
    %c0_i32_12 = arith.constant 0 : i32
    %16 = arith.cmpi eq, %arg1, %c0_i32_12 : i32
    %17 = arith.extui %16 : i1 to i32
    %c0_i32_13 = arith.constant 0 : i32
    %18 = arith.cmpi ne, %17, %c0_i32_13 : i32
    scf.if %18 {
      %c0_14 = arith.constant 0 : index
      %c0_15 = arith.constant 0 : index
      %19 = vector.load %arg10[%c0_14, %c0_15] : memref<8x128xf32, #tpu.memory_space<vmem>>, vector<8x128xf32>
      %c0_16 = arith.constant 0 : index
      %c0_17 = arith.constant 0 : index
      %20 = vector.load %arg6[%c0_16, %c0_17] : memref<1x128xf32, #tpu.memory_space<vmem>>, vector<1x128xf32>
      %21 = vector.broadcast %20 : vector<1x128xf32> to vector<8x128xf32>
      %22 = arith.addf %19, %21 : vector<8x128xf32>
      %23 = arith.addf %22, %0 : vector<8x128xf32>
      %cst_18 = arith.constant dense<0.000000e+00> : vector<8xf32>
      %24 = vector.multi_reduction <add>, %23, %cst_18 [1] : vector<8x128xf32> to vector<8xf32>
      %25 = vector.shape_cast %24 : vector<8xf32> to vector<8x1xf32>
      %cst_19 = arith.constant 3.125000e-02 : f32
      %26 = vector.broadcast %cst_19 : f32 to vector<8x1xf32>
      %27 = arith.mulf %25, %26 : vector<8x1xf32>
      %28 = vector.broadcast %27 : vector<8x1xf32> to vector<8x128xf32>
      %29 = arith.subf %23, %28 : vector<8x128xf32>
      %30 = tpu.iota {dimensions = array<i32: 1>} : vector<1x128xi32>
      %c32_i32 = arith.constant 32 : i32
      %31 = vector.broadcast %c32_i32 : i32 to vector<1x128xi32>
      %32 = arith.cmpi slt, %30, %31 : vector<1x128xi32>
      %cst_20 = arith.constant 0.000000e+00 : f32
      %33 = vector.shape_cast %32 : vector<1x128xi1> to vector<1x128xi1>
      %34 = vector.broadcast %33 : vector<1x128xi1> to vector<8x128xi1>
      %35 = vector.broadcast %cst_20 : f32 to vector<8x128xf32>
      %36 = arith.select %34, %29, %35 : vector<8x128xi1>, vector<8x128xf32>
      %37 = arith.mulf %36, %36 : vector<8x128xf32>
      %cst_21 = arith.constant dense<0.000000e+00> : vector<8xf32>
      %38 = vector.multi_reduction <add>, %37, %cst_21 [1] : vector<8x128xf32> to vector<8xf32>
      %39 = vector.shape_cast %38 : vector<8xf32> to vector<8x1xf32>
      %cst_22 = arith.constant 3.125000e-02 : f32
      %40 = vector.broadcast %cst_22 : f32 to vector<8x1xf32>
      %41 = arith.mulf %39, %40 : vector<8x1xf32>
      %cst_23 = arith.constant 9.99999974E-6 : f32
      %42 = vector.broadcast %cst_23 : f32 to vector<8x1xf32>
      %43 = arith.addf %41, %42 : vector<8x1xf32>
      %44 = math.rsqrt %43 : vector<8x1xf32>
      %45 = vector.broadcast %44 : vector<8x1xf32> to vector<8x128xf32>
      %46 = arith.mulf %36, %45 : vector<8x128xf32>
      %c0_24 = arith.constant 0 : index
      %c0_25 = arith.constant 0 : index
      %47 = vector.load %arg7[%c0_24, %c0_25] : memref<1x128xf32, #tpu.memory_space<vmem>>, vector<1x128xf32>
      %48 = vector.broadcast %47 : vector<1x128xf32> to vector<8x128xf32>
      %49 = arith.mulf %46, %48 : vector<8x128xf32>
      %c0_26 = arith.constant 0 : index
      %c0_27 = arith.constant 0 : index
      %50 = vector.load %arg8[%c0_26, %c0_27] : memref<1x128xf32, #tpu.memory_space<vmem>>, vector<1x128xf32>
      %51 = vector.broadcast %50 : vector<1x128xf32> to vector<8x128xf32>
      %52 = arith.addf %49, %51 : vector<8x128xf32>
      %c0_28 = arith.constant 0 : index
      %c0_29 = arith.constant 0 : index
      %53 = vector.load %arg9[%c0_28, %c0_29] : memref<8x128xf32, #tpu.memory_space<vmem>>, vector<8x128xf32>
      tpu.vector_store %arg9[%c0_28, %c0_29], %52 {strides = array<i32>} : memref<8x128xf32, #tpu.memory_space<vmem>>, vector<8x128xf32>,
    } else {
    }
    return
  }
  func.func @transform_0(%arg0: i32, %arg1: i32) -> (i32, i32) {
    %c0_i32 = arith.constant 0 : i32
    %c0_i32_0 = arith.constant 0 : i32
    return %arg0, %c0_i32 : i32, i32
  }
  func.func @transform_1(%arg0: i32, %arg1: i32) -> (i32, i32) {
    %c0_i32 = arith.constant 0 : i32
    %c0_i32_0 = arith.constant 0 : i32
    return %c0_i32, %arg1 : i32, i32
  }
  func.func @transform_2(%arg0: i32, %arg1: i32) -> (i32, i32) {
    %c0_i32 = arith.constant 0 : i32
    %c0_i32_0 = arith.constant 0 : i32
    return %c0_i32, %arg1 : i32, i32
  }
  func.func @transform_3(%arg0: i32, %arg1: i32) -> (i32, i32) {
    %c0_i32 = arith.constant 0 : i32
    %c0_i32_0 = arith.constant 0 : i32
    return %arg1, %c0_i32 : i32, i32
  }
  func.func @transform_4(%arg0: i32, %arg1: i32) -> (i32, i32) {
    %c0_i32 = arith.constant 0 : i32
    %c0_i32_0 = arith.constant 0 : i32
    %c0_i32_1 = arith.constant 0 : i32
    return %c0_i32, %c0_i32_0 : i32, i32
  }
  func.func @transform_5(%arg0: i32, %arg1: i32) -> (i32, i32) {
    %c0_i32 = arith.constant 0 : i32
    %c0_i32_0 = arith.constant 0 : i32
    %c0_i32_1 = arith.constant 0 : i32
    return %c0_i32, %c0_i32_0 : i32, i32
  }
  func.func @transform_6(%arg0: i32, %arg1: i32) -> (i32, i32) {
    %c0_i32 = arith.constant 0 : i32
    %c0_i32_0 = arith.constant 0 : i32
    %c0_i32_1 = arith.constant 0 : i32
    return %c0_i32, %c0_i32_0 : i32, i32
  }
  func.func @transform_7(%arg0: i32, %arg1: i32) -> (i32, i32) {
    %c0_i32 = arith.constant 0 : i32
    %c0_i32_0 = arith.constant 0 : i32
    return %arg0, %c0_i32 : i32, i32
  }
}

</mosaic_0001>

<llo_original>
// kernel: tpu_custom_call.1
$region0: #{tpu_custom_call.1}
  #allocation0 [shape = 'u32[]', space=smem, size = 0x4, offset = 0x4, fixed_abs, tag = 'smem constant byte address 0x4 - core index']
  #allocation1 [shape = 'u32[72,128]{1,0:T(1,128)}', space=vmem, size = 0x9000, scoped, tag = 'internal scratch']
  #allocation2 [shape = 'f32[8,128]{1,0:T(8,128)}', space=vmem, size = 0x1000, scoped, tag = 'scratch operand']
  %s0 = inlined_call_operand.hbm [shape: f32[16,128], index: 0, kind: input, shape index: {}]
  %s1 = inlined_call_operand.hbm [shape: f32[128,128], index: 1, kind: input, shape index: {}]
  %s2 = inlined_call_operand.vmem [shape: f32[1,128], index: 2, kind: input, shape index: {}]
  %s3 = inlined_call_operand.hbm [shape: f32[128,128], index: 3, kind: input, shape index: {}]
  %s4 = inlined_call_operand.vmem [shape: f32[1,128], index: 4, kind: input, shape index: {}]
  %s5 = inlined_call_operand.vmem [shape: f32[1,128], index: 5, kind: input, shape index: {}]
  %s6 = inlined_call_operand.vmem [shape: f32[1,128], index: 6, kind: input, shape index: {}]
  %s7 = inlined_call_operand.hbm [shape: f32[16,128], index: 7, kind: output, shape index: {}]
  %s8 = sld [smem:[#allocation0]]
  $region85: #{tpu_custom_call.1} parent=0
    _
  %s10 = ssub.s32 1, %s8
  %s11 = scalar_select 0, %s10, %s8
  $region1: #{tpu_custom_call.1} parent=0
    #allocation3 [shape = 'u8[8192]{0}', space=vmem, size = 0x2000, scoped, tag = 'input window, operand 0']
    #allocation4 [shape = 's32[2]{0}', space=sflag, size = 0x8, scoped, tag = 'scoped memory for tpu_custom_call.1']
    #allocation5 [shape = 's32[2]{0}', space=sflag, size = 0x8, scoped, tag = 'scoped memory for tpu_custom_call.1']
    #allocation6 [shape = 'u8[65536]{0}', space=vmem, size = 0x10000, scoped, tag = 'input window, operand 1, single buffered']
    #allocation7 [shape = 's32[1]{0}', space=sflag, size = 0x4, scoped, tag = 'scoped memory for tpu_custom_call.1']
    #allocation8 [shape = 'u8[65536]{0}', space=vmem, size = 0x10000, scoped, tag = 'input window, operand 3, single buffered']
    #allocation9 [shape = 'u8[8192]{0}', space=vmem, size = 0x2000, scoped, tag = 'output window, operand 0']
    %12 = vsyncpa [#allocation4], 0
    %s13 = scalar_lea.sflag [#allocation4], 1
    %14 = vsyncpa %s13, 0
    %15 = vsyncpa [#allocation7], 0
    %16 = vsyncpa [#allocation5], 0
    %s17 = scalar_lea.sflag [#allocation5], 1
    %18 = vsyncpa %s17, 0
    loop: start=0, step=1, limit=4
    $region2: #{tpu_custom_call.1} parent=1 // loop_pre_header
      _
    $region3: #{tpu_custom_call.1} parent=1 // loop_header
      %s20 = sphi 0, %s24
      %p21 = scmp.ge.s32.totalorder %s20, 4
      %s27 = sphi 0, %s39
      %s28 = sphi 0, %s35
      %s29 = sphi 0, %s27
      %s30 = sphi 0, %s28
      %s31 = sphi 0, %s29
      %s32 = sphi 0, %s30
      %s42 = sphi 0, %s44
      %s45 = sphi 0, %s42
      %s46 = sphi 0, %s45
      %s62 = sphi 0, %s46
      %s68 = sphi 0, %s70
      %s71 = sphi 0, %s68
      %s72 = sphi 0, %s71
      %s88 = sphi 0, %s72
      %s94 = sphi 0, %s96
      %s97 = sphi 0, %s94
      %s98 = sphi 0, %s97
      %s114 = sphi 0, %s98
      %s120 = sphi 0, %s122
      %s123 = sphi 0, %s120
      %s124 = sphi 0, %s123
      %s140 = sphi 0, %s124
      %s144 = sphi 0, %s144
      %s146 = sphi 0, %s144
      %s147 = sphi 0, %s146
      %s161 = sphi 0, %s147
      %s165 = sphi 0, %s165
      %s167 = sphi 0, %s165
      %s168 = sphi 0, %s167
      %s182 = sphi 0, %s168
      %s186 = sphi 0, %s186
      %s188 = sphi 0, %s186
      %s189 = sphi 0, %s188
      %s203 = sphi 0, %s189
      %s209 = sphi 0, %s211
      %s212 = sphi 0, %s209
      %s213 = sphi 0, %s212
      %s229 = sphi 0, %s213
    $region4: #{tpu_custom_call.1} parent=1 // loop_header_branch
      %23 = sbr.rel (%p21) target = $region8
    $region5: #{tpu_custom_call.1} parent=1 // loop_body
      %s25 = ssub.s32 %s20, 1
      %s26 = ssub.s32 %s20, 2
      %s33 = sadd.s32 1, %s28
      %p34 = scmp.ge.s32.totalorder %s33, 1
      %s35 = scalar_select %p34, 0, %s33
      %s36 = sadd.s32 1, %s27
      %s37 = scalar_select %p34, %s36, %s27
      %p38 = scmp.ge.s32.totalorder %s37, 2
      %s39 = scalar_select %p38, 0, %s37
      %s40 = ssub.s32 %s27, %s39
      %p41 = scmp.eq.s32.totalorder %s40, 0
      %s43 = sadd.s32 %s42, 1
      %s44 = scalar_select %p41, %s42, %s43
      %p47 = pneg %p41
      %p48 = scmp.eq.s32.totalorder %s20, 1
      %p49 = por %p47, %p48
      %p50 = scmp.ne.s32.totalorder %s42, %s45
      %p51 = scmp.eq.s32.totalorder %s20, 0
      %p52 = por %p50, %p51
      %p53 = scmp.ne.s32.totalorder %s42, %s45
      %p54 = scmp.eq.s32.totalorder %s25, 1
      %p55 = por %p53, %p54
      %p56 = scmp.ne.s32.totalorder %s45, %s46
      %p57 = scmp.eq.s32.totalorder %s25, 0
      %p58 = por %p56, %p57
      %p59 = scmp.ne.s32.totalorder %s45, %s46
      %p60 = scmp.eq.s32.totalorder %s26, 1
      %p61 = por %p59, %p60
      %p63 = scmp.ne.s32.totalorder %s46, %s62
      %p64 = scmp.eq.s32.totalorder %s26, 0
      %p65 = por %p63, %p64
      %s66 = ssub.s32 %s28, %s35
      %p67 = scmp.eq.s32.totalorder %s66, 0
      %s69 = sadd.s32 %s68, 1
      %s70 = scalar_select %p67, %s68, %s69
      %p73 = pneg %p67
      %p74 = scmp.eq.s32.totalorder %s20, 1
      %p75 = por %p73, %p74
      %p76 = scmp.ne.s32.totalorder %s68, %s71
      %p77 = scmp.eq.s32.totalorder %s20, 0
      %p78 = por %p76, %p77
      %p79 = scmp.ne.s32.totalorder %s68, %s71
      %p80 = scmp.eq.s32.totalorder %s25, 1
      %p81 = por %p79, %p80
      %p82 = scmp.ne.s32.totalorder %s71, %s72
      %p83 = scmp.eq.s32.totalorder %s25, 0
      %p84 = por %p82, %p83
      %p85 = scmp.ne.s32.totalorder %s71, %s72
      %p86 = scmp.eq.s32.totalorder %s26, 1
      %p87 = por %p85, %p86
      %p89 = scmp.ne.s32.totalorder %s72, %s88
      %p90 = scmp.eq.s32.totalorder %s26, 0
      %p91 = por %p89, %p90
      %s92 = ssub.s32 %s28, %s35
      %p93 = scmp.eq.s32.totalorder %s92, 0
      %s95 = sadd.s32 %s94, 1
      %s96 = scalar_select %p93, %s94, %s95
      %p99 = pneg %p93
      %p100 = scmp.eq.s32.totalorder %s20, 1
      %p101 = por %p99, %p100
      %p102 = scmp.ne.s32.totalorder %s94, %s97
      %p103 = scmp.eq.s32.totalorder %s20, 0
      %p104 = por %p102, %p103
      %p105 = scmp.ne.s32.totalorder %s94, %s97
      %p106 = scmp.eq.s32.totalorder %s25, 1
      %p107 = por %p105, %p106
      %p108 = scmp.ne.s32.totalorder %s97, %s98
      %p109 = scmp.eq.s32.totalorder %s25, 0
      %p110 = por %p108, %p109
      %p111 = scmp.ne.s32.totalorder %s97, %s98
      %p112 = scmp.eq.s32.totalorder %s26, 1
      %p113 = por %p111, %p112
      %p115 = scmp.ne.s32.totalorder %s98, %s114
      %p116 = scmp.eq.s32.totalorder %s26, 0
      %p117 = por %p115, %p116
      %s118 = ssub.s32 %s28, %s35
      %p119 = scmp.eq.s32.totalorder %s118, 0
      %s121 = sadd.s32 %s120, 1
      %s122 = scalar_select %p119, %s120, %s121
      %p125 = pneg %p119
      %p126 = scmp.eq.s32.totalorder %s20, 1
      %p127 = por %p125, %p126
      %p128 = scmp.ne.s32.totalorder %s120, %s123
      %p129 = scmp.eq.s32.totalorder %s20, 0
      %p130 = por %p128, %p129
      %p131 = scmp.ne.s32.totalorder %s120, %s123
      %p132 = scmp.eq.s32.totalorder %s25, 1
      %p133 = por %p131, %p132
      %p134 = scmp.ne.s32.totalorder %s123, %s124
      %p135 = scmp.eq.s32.totalorder %s25, 0
      %p136 = por %p134, %p135
      %p137 = scmp.ne.s32.totalorder %s123, %s124
      %p138 = scmp.eq.s32.totalorder %s26, 1
      %p139 = por %p137, %p138
      %p141 = scmp.ne.s32.totalorder %s124, %s140
      %p142 = scmp.eq.s32.totalorder %s26, 0
      %p143 = por %p141, %p142
      %s145 = sadd.s32 %s144, 1
      %p148 = scmp.eq.s32.totalorder %s20, 1
      %p149 = scmp.ne.s32.totalorder %s144, %s146
      %p150 = scmp.eq.s32.totalorder %s20, 0
      %p151 = por %p149, %p150
      %p152 = scmp.ne.s32.totalorder %s144, %s146
      %p153 = scmp.eq.s32.totalorder %s25, 1
      %p154 = por %p152, %p153
      %p155 = scmp.ne.s32.totalorder %s146, %s147
      %p156 = scmp.eq.s32.totalorder %s25, 0
      %p157 = por %p155, %p156
      %p158 = scmp.ne.s32.totalorder %s146, %s147
      %p159 = scmp.eq.s32.totalorder %s26, 1
      %p160 = por %p158, %p159
      %p162 = scmp.ne.s32.totalorder %s147, %s161
      %p163 = scmp.eq.s32.totalorder %s26, 0
      %p164 = por %p162, %p163
      %s166 = sadd.s32 %s165, 1
      %p169 = scmp.eq.s32.totalorder %s20, 1
      %p170 = scmp.ne.s32.totalorder %s165, %s167
      %p171 = scmp.eq.s32.totalorder %s20, 0
      %p172 = por %p170, %p171
      %p173 = scmp.ne.s32.totalorder %s165, %s167
      %p174 = scmp.eq.s32.totalorder %s25, 1
      %p175 = por %p173, %p174
      %p176 = scmp.ne.s32.totalorder %s167, %s168
      %p177 = scmp.eq.s32.totalorder %s25, 0
      %p178 = por %p176, %p177
      %p179 = scmp.ne.s32.totalorder %s167, %s168
      %p180 = scmp.eq.s32.totalorder %s26, 1
      %p181 = por %p179, %p180
      %p183 = scmp.ne.s32.totalorder %s168, %s182
      %p184 = scmp.eq.s32.totalorder %s26, 0
      %p185 = por %p183, %p184
      %s187 = sadd.s32 %s186, 1
      %p190 = scmp.eq.s32.totalorder %s20, 1
      %p191 = scmp.ne.s32.totalorder %s186, %s188
      %p192 = scmp.eq.s32.totalorder %s20, 0
      %p193 = por %p191, %p192
      %p194 = scmp.ne.s32.totalorder %s186, %s188
      %p195 = scmp.eq.s32.totalorder %s25, 1
      %p196 = por %p194, %p195
      %p197 = scmp.ne.s32.totalorder %s188, %s189
      %p198 = scmp.eq.s32.totalorder %s25, 0
      %p199 = por %p197, %p198
      %p200 = scmp.ne.s32.totalorder %s188, %s189
      %p201 = scmp.eq.s32.totalorder %s26, 1
      %p202 = por %p200, %p201
      %p204 = scmp.ne.s32.totalorder %s189, %s203
      %p205 = scmp.eq.s32.totalorder %s26, 0
      %p206 = por %p204, %p205
      %s207 = ssub.s32 %s27, %s39
      %p208 = scmp.eq.s32.totalorder %s207, 0
      %s210 = sadd.s32 %s209, 1
      %s211 = scalar_select %p208, %s209, %s210
      %p214 = pneg %p208
      %p215 = scmp.eq.s32.totalorder %s20, 1
      %p216 = por %p214, %p215
      %p217 = scmp.ne.s32.totalorder %s209, %s212
      %p218 = scmp.eq.s32.totalorder %s20, 0
      %p219 = por %p217, %p218
      %p220 = scmp.ne.s32.totalorder %s209, %s212
      %p221 = scmp.eq.s32.totalorder %s25, 1
      %p222 = por %p220, %p221
      %p223 = scmp.ne.s32.totalorder %s212, %s213
      %p224 = scmp.eq.s32.totalorder %s25, 0
      %p225 = por %p223, %p224
      %p226 = scmp.ne.s32.totalorder %s212, %s213
      %p227 = scmp.eq.s32.totalorder %s26, 1
      %p228 = por %p226, %p227
      %p230 = scmp.ne.s32.totalorder %s213, %s229
      %p231 = scmp.eq.s32.totalorder %s26, 0
      %p232 = por %p230, %p231
      %p233 = scmp.le.s32.totalorder 1, %s20
      %p234 = scmp.lt.s32.totalorder %s20, 3
      %p235 = pnand %p233, %p234
      %p236 = pneg %p235
      // Predicated region
      $region9: #{tpu_custom_call.1} parent=5 // pred_check
        _
      $region10: #{tpu_custom_call.1} parent=5 // pred_check_branch
        %238 = sbr.rel (%p235) target = $region12
      $region11: #{tpu_custom_call.1} parent=5 // pred_region
        %s239 = ssub.s32 %s20, 1
        // Predicated region
        $region13: #{tpu_custom_call.1} parent=11 // pred_check
          %p240 = pneg %p84
        $region14: #{tpu_custom_call.1} parent=11 // pred_check_branch
          %242 = sbr.rel (%p240) target = $region16
        $region15: #{tpu_custom_call.1} parent=11 // pred_region
          %244 = vsyncadd [#allocation7], 0
          %s245 = smul.addr %s30, 8
          %s246 = scalar_lea.hbm %s1, %s245
          %s247 = sshll.u32 %s246, 4
          %s248 = int_to_ptr.hbm [resolvable:$true] %s247
          %s249 = sshll.u32 [#allocation6], 4
          %s250 = int_to_ptr.vmem [resolvable:$true] %s249
          %255 = dma.hbm_to_vmem [thread:$0]  %s248, 2048, %s250, [#allocation7], 128, 128, 8
        $region16: #{tpu_custom_call.1} parent=11 // pred_fallthru
          _
        // Predicated region
        $region17: #{tpu_custom_call.1} parent=11 // pred_check
          %p256 = pneg %p110
        $region18: #{tpu_custom_call.1} parent=11 // pred_check_branch
          %258 = sbr.rel (%p256) target = $region20
        $region19: #{tpu_custom_call.1} parent=11 // pred_region
          %p259 = scmp.lt.s32.totalorder %s30, 0
          %s260 = scalar_select %p259, %s30, 0
          %s261 = scalar_lea.vmem %s2, %s260
        $region20: #{tpu_custom_call.1} parent=11 // pred_fallthru
          _
        // Predicated region
        $region21: #{tpu_custom_call.1} parent=11 // pred_check
          %p262 = pneg %p136
        $region22: #{tpu_custom_call.1} parent=11 // pred_check_branch
          %264 = sbr.rel (%p262) target = $region24
        $region23: #{tpu_custom_call.1} parent=11 // pred_region
          %s265 = smul.u32 16, %s30
          %267 = vsyncadd [#allocation7], 0
          %s268 = smul.addr %s265, 8
          %s269 = scalar_lea.hbm %s3, %s268
          %s270 = sshll.u32 %s269, 4
          %s271 = int_to_ptr.hbm [resolvable:$true] %s270
          %s272 = sshll.u32 [#allocation8], 4
          %s273 = int_to_ptr.vmem [resolvable:$true] %s272
          %278 = dma.hbm_to_vmem [thread:$0]  %s271, 2048, %s273, [#allocation7], 128, 128, 8
        $region24: #{tpu_custom_call.1} parent=11 // pred_fallthru
          _
        // Predicated region
        $region25: #{tpu_custom_call.1} parent=11 // pred_check
          %p279 = pneg %p157
        $region26: #{tpu_custom_call.1} parent=11 // pred_check_branch
          %281 = sbr.rel (%p279) target = $region28
        $region27: #{tpu_custom_call.1} parent=11 // pred_region
          _
        $region28: #{tpu_custom_call.1} parent=11 // pred_fallthru
          _
        // Predicated region
        $region29: #{tpu_custom_call.1} parent=11 // pred_check
          %p282 = pneg %p178
        $region30: #{tpu_custom_call.1} parent=11 // pred_check_branch
          %284 = sbr.rel (%p282) target = $region32
        $region31: #{tpu_custom_call.1} parent=11 // pred_region
          _
        $region32: #{tpu_custom_call.1} parent=11 // pred_fallthru
          _
        // Predicated region
        $region33: #{tpu_custom_call.1} parent=11 // pred_check
          %p285 = pneg %p199
        $region34: #{tpu_custom_call.1} parent=11 // pred_check_branch
          %287 = sbr.rel (%p285) target = $region36
        $region35: #{tpu_custom_call.1} parent=11 // pred_region
          _
        $region36: #{tpu_custom_call.1} parent=11 // pred_fallthru
          _
      $region12: #{tpu_custom_call.1} parent=5 // pred_fallthru
        _
      %p288 = scmp.lt.s32.totalorder %s20, 2
      // Predicated region
      $region37: #{tpu_custom_call.1} parent=5 // pred_check
        %p289 = pneg %p288
      $region38: #{tpu_custom_call.1} parent=5 // pred_check_branch
        %291 = sbr.rel (%p289) target = $region40
      $region39: #{tpu_custom_call.1} parent=5 // pred_region
        // Predicated region
        $region41: #{tpu_custom_call.1} parent=39 // pred_check
          %p292 = pneg %p52
        $region42: #{tpu_custom_call.1} parent=39 // pred_check_branch
          %294 = sbr.rel (%p292) target = $region44
        $region43: #{tpu_custom_call.1} parent=39 // pred_region
          %s295 = sand.u32 %s42, 1
          %s296 = scalar_lea.sflag [#allocation4], %s295
          %s297 = sand.u32 %s42, 1
          %s298 = smul.addr %s297, 8
          %s299 = scalar_lea.vmem [#allocation3], %s298
          %301 = vsyncadd %s296, 0
          %s302 = smul.addr %s27, 8
          %s303 = scalar_lea.hbm %s0, %s302
          %s305 = sshll.u32 %s303, 4
          %s306 = int_to_ptr.hbm [resolvable:$true] %s305
          %s307 = sshll.u32 %s299, 4
          %s308 = int_to_ptr.vmem [resolvable:$true] %s307
          %310 = dma.hbm_to_vmem [thread:$0]  %s306, 128, %s308, %s296
        $region44: #{tpu_custom_call.1} parent=39 // pred_fallthru
          _
      $region40: #{tpu_custom_call.1} parent=5 // pred_fallthru
        _
      %p311 = scmp.le.s32.totalorder 1, %s20
      %p312 = scmp.lt.s32.totalorder %s20, 3
      %p313 = pnand %p311, %p312
      %p314 = pneg %p313
      // Predicated region
      $region45: #{tpu_custom_call.1} parent=5 // pred_check
        _
      $region46: #{tpu_custom_call.1} parent=5 // pred_check_branch
        %316 = sbr.rel (%p313) target = $region48
      $region47: #{tpu_custom_call.1} parent=5 // pred_region
        %s317 = ssub.s32 %s20, 1
        %s318 = sand.u32 %s45, 1
        %s319 = scalar_lea.sflag [#allocation4], %s318
        %s320 = sand.u32 %s45, 1
        %s321 = smul.addr %s320, 8
        %s322 = scalar_lea.vmem [#allocation3], %s321
        // Predicated region
        $region49: #{tpu_custom_call.1} parent=47 // pred_check
          %p323 = pneg %p58
        $region50: #{tpu_custom_call.1} parent=47 // pred_check_branch
          %325 = sbr.rel (%p323) target = $region52
        $region51: #{tpu_custom_call.1} parent=47 // pred_region
          %327 = dma.done %s319, 128
        $region52: #{tpu_custom_call.1} parent=47 // pred_fallthru
          _
        // Predicated region
        $region53: #{tpu_custom_call.1} parent=47 // pred_check
          %p328 = pneg %p84
        $region54: #{tpu_custom_call.1} parent=47 // pred_check_branch
          %330 = sbr.rel (%p328) target = $region56
        $region55: #{tpu_custom_call.1} parent=47 // pred_region
          %332 = dma.done [#allocation7], 2048
        $region56: #{tpu_custom_call.1} parent=47 // pred_fallthru
          _
        // Predicated region
        $region57: #{tpu_custom_call.1} parent=47 // pred_check
          %p333 = pneg %p136
        $region58: #{tpu_custom_call.1} parent=47 // pred_check_branch
          %335 = sbr.rel (%p333) target = $region60
        $region59: #{tpu_custom_call.1} parent=47 // pred_region
          %337 = dma.done [#allocation7], 2048
        $region60: #{tpu_custom_call.1} parent=47 // pred_fallthru
          _
        %s338 = sand.u32 %s45, 1
        %s339 = scalar_lea.sflag [#allocation4], %s338
        %s340 = sand.u32 %s45, 1
        %s341 = smul.addr %s340, 8
        %s342 = scalar_lea.vmem [#allocation3], %s341
        %p343 = pneg %p58
        %p344 = pneg %p55
        %p345 = pneg %p84
        %p346 = pneg %p81
        %p347 = scmp.lt.s32.totalorder %s30, 0
        %s348 = scalar_select %p347, %s30, 0
        %s349 = scalar_lea.vmem %s2, %s348
        %p350 = pneg %p110
        %p351 = pneg %p107
        %p352 = pneg %p136
        %p353 = pneg %p133
        %p354 = pneg %p157
        %p355 = pneg %p154
        %p356 = pneg %p178
        %p357 = pneg %p175
        %p358 = pneg %p199
        %p359 = pneg %p196
        %p360 = pneg %p225
        %p361 = pneg %p222
        %s362 = sand.u32 %s212, 1
        %s363 = scalar_lea.sflag [#allocation5], %s362
        %s364 = sand.u32 %s212, 1
        %s365 = smul.addr %s364, 8
        %s366 = scalar_lea.vmem [#allocation9], %s365
        %p367 = scmp.lt.s32.totalorder %s30, 0
        %s368 = scalar_select %p367, %s30, 0
        %s369 = scalar_lea.vmem %s2, %s368
        %s370 = smul.u32 16, %s30
        %v371 = vld [vmem:[%s322] sm:$0xff]
        %v372 = vld [vmem:[#allocation6] sm:$0xff]
        %v373 = vld [vmem:[#allocation6 + $0x8] sm:$0xff]
        %v374 = vld [vmem:[#allocation6 + $0x10] sm:$0xff]
        %v375 = vld [vmem:[#allocation6 + $0x18] sm:$0xff]
        %v376 = vld [vmem:[#allocation6 + $0x20] sm:$0xff]
        %v377 = vld [vmem:[#allocation6 + $0x28] sm:$0xff]
        %v378 = vld [vmem:[#allocation6 + $0x30] sm:$0xff]
        %v379 = vld [vmem:[#allocation6 + $0x38] sm:$0xff]
        %v380 = vld [vmem:[#allocation6 + $0x40] sm:$0xff]
        %v381 = vld [vmem:[#allocation6 + $0x48] sm:$0xff]
        %v382 = vld [vmem:[#allocation6 + $0x50] sm:$0xff]
        %v383 = vld [vmem:[#allocation6 + $0x58] sm:$0xff]
        %v384 = vld [vmem:[#allocation6 + $0x60] sm:$0xff]
        %v385 = vld [vmem:[#allocation6 + $0x68] sm:$0xff]
        %v386 = vld [vmem:[#allocation6 + $0x70] sm:$0xff]
        %v387 = vld [vmem:[#allocation6 + $0x78] sm:$0xff]
        %v388 = vld [vmem:[%s369] sm:$0x1]
        %v390 = vperm.slane %v388, 0
        %392 = vmatpush.msra.mxu0 %v387
        %393 = vmatpush.msra.mxu0 %v386
        %394 = vmatpush.msra.mxu0 %v385
        %395 = vmatpush.msra.mxu0 %v384
        %396 = vmatpush.msra.mxu0 %v383
        %397 = vmatpush.msra.mxu0 %v382
        %398 = vmatpush.msra.mxu0 %v381
        %399 = vmatpush.msra.mxu0 %v380
        %400 = vmatpush.msra.mxu0 %v379
        %401 = vmatpush.msra.mxu0 %v378
        %402 = vmatpush.msra.mxu0 %v377
        %403 = vmatpush.msra.mxu0 %v376
        %404 = vmatpush.msra.mxu0 %v375
        %405 = vmatpush.msra.mxu0 %v374
        %406 = vmatpush.msra.mxu0 %v373
        %407 = vmatpush.msra.mxu0 %v372
        %408 = vmatmul.f32.gmra.mxu0 %v371
        %v409 = vpop.f32.mrf.mxu0
        %v410 = vadd.f32 %v390, %v409
        %411 = vdwg.mxu0
        %v412 = vmax.f32 %v410, 0.0
        %v413 = vld [vmem:[#allocation8] sm:$0xff]
        %v414 = vld [vmem:[#allocation8 + $0x8] sm:$0xff]
        %v415 = vld [vmem:[#allocation8 + $0x10] sm:$0xff]
        %v416 = vld [vmem:[#allocation8 + $0x18] sm:$0xff]
        %v417 = vld [vmem:[#allocation8 + $0x20] sm:$0xff]
        %v418 = vld [vmem:[#allocation8 + $0x28] sm:$0xff]
        %v419 = vld [vmem:[#allocation8 + $0x30] sm:$0xff]
        %v420 = vld [vmem:[#allocation8 + $0x38] sm:$0xff]
        %v421 = vld [vmem:[#allocation8 + $0x40] sm:$0xff]
        %v422 = vld [vmem:[#allocation8 + $0x48] sm:$0xff]
        %v423 = vld [vmem:[#allocation8 + $0x50] sm:$0xff]
        %v424 = vld [vmem:[#allocation8 + $0x58] sm:$0xff]
        %v425 = vld [vmem:[#allocation8 + $0x60] sm:$0xff]
        %v426 = vld [vmem:[#allocation8 + $0x68] sm:$0xff]
        %v427 = vld [vmem:[#allocation8 + $0x70] sm:$0xff]
        %v428 = vld [vmem:[#allocation8 + $0x78] sm:$0xff]
        %429 = vmatpush.msra.mxu0 %v428
        %430 = vmatpush.msra.mxu0 %v427
        %431 = vmatpush.msra.mxu0 %v426
        %432 = vmatpush.msra.mxu0 %v425
        %433 = vmatpush.msra.mxu0 %v424
        %434 = vmatpush.msra.mxu0 %v423
        %435 = vmatpush.msra.mxu0 %v422
        %436 = vmatpush.msra.mxu0 %v421
        %437 = vmatpush.msra.mxu0 %v420
        %438 = vmatpush.msra.mxu0 %v419
        %439 = vmatpush.msra.mxu0 %v418
        %440 = vmatpush.msra.mxu0 %v417
        %441 = vmatpush.msra.mxu0 %v416
        %442 = vmatpush.msra.mxu0 %v415
        %443 = vmatpush.msra.mxu0 %v414
        %444 = vmatpush.msra.mxu0 %v413
        %445 = vmatmul.f32.gmra.mxu0 %v412
        %v446 = vpop.f32.mrf.mxu0
        %v447 = vadd.f32 0.0, %v446
        %448 = vdwg.mxu0
        %p449 = scmp.eq.s32.totalorder %s30, 0
        // Predicated region
        $region61: #{tpu_custom_call.1} parent=47 // pred_check
          %p450 = pneg %p449
        $region62: #{tpu_custom_call.1} parent=47 // pred_check_branch
          %452 = sbr.rel (%p450) target = $region64
        $region63: #{tpu_custom_call.1} parent=47 // pred_region
          %453 = vst [vmem:[#allocation2] sm:$0xff] %v447
        $region64: #{tpu_custom_call.1} parent=47 // pred_fallthru
          _
        %p454 = scmp.ne.s32.totalorder %s30, 0
        // Predicated region
        $region65: #{tpu_custom_call.1} parent=47 // pred_check
          %p455 = pneg %p454
        $region66: #{tpu_custom_call.1} parent=47 // pred_check_branch
          %457 = sbr.rel (%p455) target = $region68
        $region67: #{tpu_custom_call.1} parent=47 // pred_region
          %v458 = vld [vmem:[#allocation2] sm:$0xff]
          %v459 = vadd.f32 %v458, %v447
          %460 = vst [vmem:[#allocation2] sm:$0xff] %v459
        $region68: #{tpu_custom_call.1} parent=47 // pred_fallthru
          _
        // Predicated region
        $region69: #{tpu_custom_call.1} parent=47 // pred_check
          %p461 = pneg %p449
        $region70: #{tpu_custom_call.1} parent=47 // pred_check_branch
          %463 = sbr.rel (%p461) target = $region72
        $region71: #{tpu_custom_call.1} parent=47 // pred_region
          %v464 = vld [vmem:[#allocation2] sm:$0xff]
          %v465 = vld [vmem:[%s4] sm:$0x1]
          %v467 = vperm.slane %v465, 0
          %v469 = vadd.f32 %v464, %v467
          %v470 = vadd.f32 %v469, %v371
          %471 = vadd.xlane.f32.xlu0 %v470
          %v472 = vpop.xlane.xlu0 %471
          %v473 = vmul.f32 %v472, 0.03125
          %v474 = vsub.f32 %v470, %v473
          %v475 = vlaneseq
          %v476 = vand.u32 %v475, 127
          %vm477 = vcmp.lt.s32.totalorder %v476, 32
          %v478 = vsel %vm477, 1, 0
          %vm479 = vcmp.eq.s32.totalorder %v478, 1
          %v480 = vsel %vm479, %v474, 0.0
          %v481 = vmul.f32 %v480, %v480
          %482 = vadd.xlane.f32.xlu0 %v481
          %v483 = vpop.xlane.xlu0 %482
          %v484 = vmul.f32 %v483, 0.03125
          %v485 = vadd.f32 %v484, 1e-05
          %v486 = vrsqrt.pop %v485
          %v487 = vmul.f32 %v486, %v485
          %v488 = vmul.f32 %v487, %v486
          %v489 = vmul.f32 0.5, %v488
          %v490 = vsub.f32 1.5, %v489
          %v491 = vmul.f32 %v486, %v490
          %vm492 = vweird.f32 %v485
          %vm493 = vweird.f32 %v486
          %vm494 = vmor %vm492, %vm493
          %v495 = vsel %vm494, %v486, %v491
          %v496 = vmul.f32 %v480, %v495
          %v497 = vld [vmem:[%s5] sm:$0x1]
          %v499 = vperm.slane %v497, 0
          %v501 = vmul.f32 %v496, %v499
          %v502 = vld [vmem:[%s6] sm:$0x1]
          %v504 = vperm.slane %v502, 0
          %v506 = vadd.f32 %v501, %v504
          %507 = vst [vmem:[%s366] sm:$0xff] %v506
        $region72: #{tpu_custom_call.1} parent=47 // pred_fallthru
          _
        %s508 = sand.u32 %s212, 1
        %s509 = scalar_lea.sflag [#allocation5], %s508
        %s510 = sand.u32 %s212, 1
        %s511 = smul.addr %s510, 8
        %s512 = scalar_lea.vmem [#allocation9], %s511
        // Predicated region
        $region73: #{tpu_custom_call.1} parent=47 // pred_check
          %p513 = pneg %p222
        $region74: #{tpu_custom_call.1} parent=47 // pred_check_branch
          %515 = sbr.rel (%p513) target = $region76
        $region75: #{tpu_custom_call.1} parent=47 // pred_region
          %517 = vsyncadd %s509, 0
          %s518 = smul.addr %s29, 8
          %s519 = scalar_lea.hbm %s7, %s518
          %s521 = sshll.u32 %s512, 4
          %s522 = int_to_ptr.vmem [resolvable:$true] %s521
          %s523 = sshll.u32 %s519, 4
          %s524 = int_to_ptr.hbm [resolvable:$true] %s523
          %526 = dma.vmem_to_hbm [thread:$0]  %s522, 128, %s524, %s509
        $region76: #{tpu_custom_call.1} parent=47 // pred_fallthru
          _
      $region48: #{tpu_custom_call.1} parent=5 // pred_fallthru
        _
      %p527 = scmp.le.s32.totalorder 2, %s20
      // Predicated region
      $region77: #{tpu_custom_call.1} parent=5 // pred_check
        %p528 = pneg %p527
      $region78: #{tpu_custom_call.1} parent=5 // pred_check_branch
        %530 = sbr.rel (%p528) target = $region80
      $region79: #{tpu_custom_call.1} parent=5 // pred_region
        %s531 = ssub.s32 %s20, 2
        // Predicated region
        $region81: #{tpu_custom_call.1} parent=79 // pred_check
          %p532 = pneg %p228
        $region82: #{tpu_custom_call.1} parent=79 // pred_check_branch
          %534 = sbr.rel (%p532) target = $region84
        $region83: #{tpu_custom_call.1} parent=79 // pred_region
          %s535 = sand.u32 %s213, 1
          %s536 = scalar_lea.sflag [#allocation5], %s535
          %s537 = sand.u32 %s213, 1
          %s538 = smul.addr %s537, 8
          %s539 = scalar_lea.vmem [#allocation9], %s538
          %541 = dma.done %s536, 128
        $region84: #{tpu_custom_call.1} parent=79 // pred_fallthru
          _
      $region80: #{tpu_custom_call.1} parent=5 // pred_fallthru
        _
    $region6: #{tpu_custom_call.1} parent=1 // loop_footer
      %s24 = sadd.s32 1, %s20
    $region7: #{tpu_custom_call.1} parent=1 // loop_footer_branch
      %19 = sbr.rel target = $region3
    $region8: #{tpu_custom_call.1} parent=1 // loop_exit
      _
    %542 = vsyncpa [#allocation4], 1
    %s543 = scalar_lea.sflag [#allocation4], 1
    %544 = vsyncpa %s543, 1
    %545 = vsyncpa [#allocation7], 1
    %546 = vsyncpa [#allocation5], 1
    %s547 = scalar_lea.sflag [#allocation5], 1
    %548 = vsyncpa %s547, 1

</llo_original>
